<compile_context>
chip_gen: v5e
topology: v5e:2x2
jax: 0.10.0
libtpu: 0.0.40
codegen_flags: <defaults>
</compile_context>

<pallas_src>
import functools

import jax
import jax.numpy as jnp
from jax import lax
from jax.experimental import pallas as pl
from jax.experimental.pallas import tpu as pltpu


def _block_kernel(adj_ref, x_ref,
                  wg_ref, bg_ref,
                  w1_ref, b1_ref,
                  w2_ref, b2_ref,
                  gamma_ref, beta_ref,
                  out_ref):
    # adj_ref: (TN, Np)  -- one row-tile of one batch element
    # x_ref  : (Np, D)   -- full node set of that batch element
    adj = adj_ref[...]
    x = x_ref[...]

    # ---- graph convolution (stand-in): ReLU((adj @ x) @ Wg + bg) ----
    agg = jnp.dot(adj, x, preferred_element_type=jnp.float32)            # (TN, D)
    h = jnp.dot(agg, wg_ref[...], preferred_element_type=jnp.float32)    # (TN, D)
    h = jnp.maximum(h + bg_ref[...], 0.0)

    # ---- Intermediate: fc1 -> ReLU -> fc2 -> dropout(id) -> LN(out + residual) ----
    residual = h
    o = jnp.dot(h, w1_ref[...], preferred_element_type=jnp.float32) + b1_ref[...]
    o = jnp.maximum(o, 0.0)                                              # ReLU activation
    o = jnp.dot(o, w2_ref[...], preferred_element_type=jnp.float32) + b2_ref[...]
    # dropout: eval mode -> identity
    y = o + residual
    mean = jnp.mean(y, axis=-1, keepdims=True)
    var = jnp.mean(jnp.square(y - mean), axis=-1, keepdims=True)
    y_n = (y - mean) * lax.rsqrt(var + 1e-5)                             # rsqrt -> EUP
    out_ref[...] = (y_n * gamma_ref[...] + beta_ref[...]).astype(out_ref.dtype)


def _round_up(x, m):
    return (x + m - 1) // m * m


def block_forward(adj, relative_pos, inputs, params):
    """Forward pass of Block.  relative_pos accepted for API parity (unused)."""
    del relative_pos  # TODO(synk): unused by the stand-in convolution; never DMA'd.
    B, N, D = inputs.shape
    H = 4 * D
    wg, bg, w1, b1, w2, b2, gamma, beta = params

    # Row tile: 128 rows (one full MXU M-pass on v5e, bounded padding waste),
    # or the 8-padded full N for small problems.
    TN = min(128, _round_up(N, 8))
    Np = _round_up(N, TN)

    if Np != N:
        pad_n = Np - N
        adj = jnp.pad(adj, ((0, 0), (0, pad_n), (0, pad_n)))
        x = jnp.pad(inputs, ((0, 0), (0, pad_n), (0, 0)))
    else:
        x = inputs

    num_row_tiles = Np // TN

    shared2 = lambda shape: pl.BlockSpec(shape, lambda b, t: (0, 0))

    out = pl.pallas_call(
        _block_kernel,
        out_shape=jax.ShapeDtypeStruct((B, Np, D), inputs.dtype),
        grid=(B, num_row_tiles),
        in_specs=[
            # adjacency row tile: (TN, Np); leading batch dim squeezed out
            pl.BlockSpec((None, TN, Np), lambda b, t: (b, t, 0)),
            # full node features for this batch element (constant across row tiles,
            # so it is not re-fetched on the inner grid axis)
            pl.BlockSpec((None, Np, D), lambda b, t: (b, 0, 0)),
            shared2((D, D)),    # Wg
            shared2((1, D)),    # bg
            shared2((D, H)),    # W1
            shared2((1, H)),    # b1
            shared2((H, D)),    # W2
            shared2((1, D)),    # b2
            shared2((1, D)),    # gamma
            shared2((1, D)),    # beta
        ],
        out_specs=pl.BlockSpec((None, TN, D), lambda b, t: (b, t, 0)),
        compiler_params=pltpu.CompilerParams(
            dimension_semantics=("parallel", "parallel")),
    )(adj, x, wg, bg, w1, b1, w2, b2, gamma, beta)

    if Np != N:
        out = out[:, :N, :]
    return out


def _reference(adj, rel, x, params):
    del rel
    wg, bg, w1, b1, w2, b2, gamma, beta = params
    h = jnp.maximum(jnp.einsum("bij,bjd->bid", adj, x) @ wg + bg[0], 0.0)
    o = jnp.maximum(h @ w1 + b1[0], 0.0)
    o = o @ w2 + b2[0]
    y = o + h
    mean = jnp.mean(y, axis=-1, keepdims=True)
    var = jnp.mean((y - mean) ** 2, axis=-1, keepdims=True)
    return (y - mean) / jnp.sqrt(var + 1e-5) * gamma[0] + beta[0]


if __name__ == "__main__":
    B, N, D = 2, 8, 32
    H = 4 * D

    key = jax.random.PRNGKey(0)
    keys = jax.random.split(key, 8)

    # Deterministic synthetic parameters.
    wg = jax.random.normal(keys[0], (D, D), jnp.float32) * 0.1
    bg = jnp.zeros((1, D), jnp.float32)
    w1 = jax.random.normal(keys[1], (D, H), jnp.float32) * 0.1
    b1 = jnp.zeros((1, H), jnp.float32)
    w2 = jax.random.normal(keys[2], (H, D), jnp.float32) * 0.1
    b2 = jnp.zeros((1, D), jnp.float32)
    gamma = jnp.ones((1, D), jnp.float32)
    beta = jnp.zeros((1, D), jnp.float32)
    params = (wg, bg, w1, b1, w2, b2, gamma, beta)

    # Deterministic synthetic inputs.
    inputs = jax.random.normal(keys[3], (B, N, D), jnp.float32)
    adj_logits = jax.random.uniform(keys[4], (B, N, N), jnp.float32)
    adj = adj_logits / jnp.sum(adj_logits, axis=-1, keepdims=True)  # row-normalized
    relative_pos = jax.random.normal(keys[5], (B, N, N), jnp.float32)

    out = block_forward(adj, relative_pos, inputs, params)
    out = jax.block_until_ready(out)

    ref = _reference(adj, relative_pos, inputs, params)
    assert out.shape == (B, N, D)
    assert jnp.allclose(out, ref, atol=1e-4, rtol=1e-4)

    print("KERNEL_OK")
</pallas_src>

<mosaic_0001>
module attributes {stable_mosaic.version = 11 : i64} {
  func.func @_block_kernel(%arg0: i32, %arg1: i32, %arg2: memref<1x8x8xf32, #tpu.memory_space<vmem>>, %arg3: memref<1x8x32xf32, #tpu.memory_space<vmem>>, %arg4: memref<32x32xf32, #tpu.memory_space<vmem>>, %arg5: memref<1x32xf32, #tpu.memory_space<vmem>>, %arg6: memref<32x128xf32, #tpu.memory_space<vmem>>, %arg7: memref<1x128xf32, #tpu.memory_space<vmem>>, %arg8: memref<128x32xf32, #tpu.memory_space<vmem>>, %arg9: memref<1x32xf32, #tpu.memory_space<vmem>>, %arg10: memref<1x32xf32, #tpu.memory_space<vmem>>, %arg11: memref<1x32xf32, #tpu.memory_space<vmem>>, %arg12: memref<1x8x32xf32, #tpu.memory_space<vmem>>) attributes {dimension_semantics = [#tpu.dimension_semantics<parallel>, #tpu.dimension_semantics<parallel>], iteration_bounds = array<i64: 2, 1>, scalar_prefetch = 0 : i64, scratch_operands = 0 : i64, tpu.core_type = #tpu.core_type<tc>, window_params = [{transform_indices = @transform_0, window_bounds = array<i64: 1, 8, 8>}, {transform_indices = @transform_1, window_bounds = array<i64: 1, 8, 32>}, {pipeline_mode = #tpu.pipeline_mode<synchronous>, transform_indices = @transform_2, window_bounds = array<i64: 32, 32>}, {pipeline_mode = #tpu.pipeline_mode<synchronous>, transform_indices = @transform_3, window_bounds = array<i64: 1, 32>}, {pipeline_mode = #tpu.pipeline_mode<synchronous>, transform_indices = @transform_4, window_bounds = array<i64: 32, 128>}, {pipeline_mode = #tpu.pipeline_mode<synchronous>, transform_indices = @transform_5, window_bounds = array<i64: 1, 128>}, {pipeline_mode = #tpu.pipeline_mode<synchronous>, transform_indices = @transform_6, window_bounds = array<i64: 128, 32>}, {pipeline_mode = #tpu.pipeline_mode<synchronous>, transform_indices = @transform_7, window_bounds = array<i64: 1, 32>}, {pipeline_mode = #tpu.pipeline_mode<synchronous>, transform_indices = @transform_8, window_bounds = array<i64: 1, 32>}, {pipeline_mode = #tpu.pipeline_mode<synchronous>, transform_indices = @transform_9, window_bounds = array<i64: 1, 32>}, {transform_indices = @transform_10, window_bounds = array<i64: 1, 8, 32>}]} {
    %c0 = arith.constant 0 : index
    %c0_0 = arith.constant 0 : index
    %c0_1 = arith.constant 0 : index
    %0 = vector.load %arg2[%c0, %c0_0, %c0_1] : memref<1x8x8xf32, #tpu.memory_space<vmem>>, vector<1x8x8xf32>
    %1 = vector.shape_cast %0 : vector<1x8x8xf32> to vector<8x8xf32>
    %c0_2 = arith.constant 0 : index
    %c0_3 = arith.constant 0 : index
    %c0_4 = arith.constant 0 : index
    %2 = vector.load %arg3[%c0_2, %c0_3, %c0_4] : memref<1x8x32xf32, #tpu.memory_space<vmem>>, vector<1x8x32xf32>
    %3 = vector.shape_cast %2 : vector<1x8x32xf32> to vector<8x32xf32>
    %cst = arith.constant dense<0.000000e+00> : vector<8x32xf32>
    %4 = tpu.matmul %1, %3, %cst {dimension_numbers = #tpu.dot_dimension_numbers<[1], [0], [0], [1], [0, 0, 1, 1], [], []>} : vector<8x8xf32>, vector<8x32xf32>, vector<8x32xf32> -> vector<8x32xf32>
    %c0_5 = arith.constant 0 : index
    %c0_6 = arith.constant 0 : index
    %5 = vector.load %arg4[%c0_5, %c0_6] : memref<32x32xf32, #tpu.memory_space<vmem>>, vector<32x32xf32>
    %cst_7 = arith.constant dense<0.000000e+00> : vector<8x32xf32>
    %6 = tpu.matmul %4, %5, %cst_7 {dimension_numbers = #tpu.dot_dimension_numbers<[1], [0], [0], [1], [0, 0, 1, 1], [], []>} : vector<8x32xf32>, vector<32x32xf32>, vector<8x32xf32> -> vector<8x32xf32>
    %c0_8 = arith.constant 0 : index
    %c0_9 = arith.constant 0 : index
    %7 = vector.load %arg5[%c0_8, %c0_9] : memref<1x32xf32, #tpu.memory_space<vmem>>, vector<1x32xf32>
    %8 = vector.broadcast %7 : vector<1x32xf32> to vector<8x32xf32>
    %9 = arith.addf %6, %8 : vector<8x32xf32>
    %cst_10 = arith.constant 0.000000e+00 : f32
    %10 = vector.broadcast %cst_10 : f32 to vector<8x32xf32>
    %11 = arith.maximumf %9, %10 : vector<8x32xf32>
    %c0_11 = arith.constant 0 : index
    %c0_12 = arith.constant 0 : index
    %12 = vector.load %arg6[%c0_11, %c0_12] : memref<32x128xf32, #tpu.memory_space<vmem>>, vector<32x128xf32>
    %cst_13 = arith.constant dense<0.000000e+00> : vector<8x128xf32>
    %13 = tpu.matmul %11, %12, %cst_13 {dimension_numbers = #tpu.dot_dimension_numbers<[1], [0], [0], [1], [0, 0, 1, 1], [], []>} : vector<8x32xf32>, vector<32x128xf32>, vector<8x128xf32> -> vector<8x128xf32>
    %c0_14 = arith.constant 0 : index
    %c0_15 = arith.constant 0 : index
    %14 = vector.load %arg7[%c0_14, %c0_15] : memref<1x128xf32, #tpu.memory_space<vmem>>, vector<1x128xf32>
    %15 = vector.broadcast %14 : vector<1x128xf32> to vector<8x128xf32>
    %16 = arith.addf %13, %15 : vector<8x128xf32>
    %cst_16 = arith.constant 0.000000e+00 : f32
    %17 = vector.broadcast %cst_16 : f32 to vector<8x128xf32>
    %18 = arith.maximumf %16, %17 : vector<8x128xf32>
    %c0_17 = arith.constant 0 : index
    %c0_18 = arith.constant 0 : index
    %19 = vector.load %arg8[%c0_17, %c0_18] : memref<128x32xf32, #tpu.memory_space<vmem>>, vector<128x32xf32>
    %cst_19 = arith.constant dense<0.000000e+00> : vector<8x32xf32>
    %20 = tpu.matmul %18, %19, %cst_19 {dimension_numbers = #tpu.dot_dimension_numbers<[1], [0], [0], [1], [0, 0, 1, 1], [], []>} : vector<8x128xf32>, vector<128x32xf32>, vector<8x32xf32> -> vector<8x32xf32>
    %c0_20 = arith.constant 0 : index
    %c0_21 = arith.constant 0 : index
    %21 = vector.load %arg9[%c0_20, %c0_21] : memref<1x32xf32, #tpu.memory_space<vmem>>, vector<1x32xf32>
    %22 = vector.broadcast %21 : vector<1x32xf32> to vector<8x32xf32>
    %23 = arith.addf %20, %22 : vector<8x32xf32>
    %24 = arith.addf %23, %11 : vector<8x32xf32>
    %cst_22 = arith.constant dense<0.000000e+00> : vector<8xf32>
    %25 = vector.multi_reduction <add>, %24, %cst_22 [1] : vector<8x32xf32> to vector<8xf32>
    %26 = vector.shape_cast %25 : vector<8xf32> to vector<8x1xf32>
    %cst_23 = arith.constant 3.200000e+01 : f32
    %27 = vector.broadcast %cst_23 : f32 to vector<8x1xf32>
    %28 = arith.divf %26, %27 : vector<8x1xf32>
    %29 = vector.broadcast %28 : vector<8x1xf32> to vector<8x32xf32>
    %30 = arith.subf %24, %29 : vector<8x32xf32>
    %31 = arith.mulf %30, %30 : vector<8x32xf32>
    %cst_24 = arith.constant dense<0.000000e+00> : vector<8xf32>
    %32 = vector.multi_reduction <add>, %31, %cst_24 [1] : vector<8x32xf32> to vector<8xf32>
    %33 = vector.shape_cast %32 : vector<8xf32> to vector<8x1xf32>
    %cst_25 = arith.constant 3.200000e+01 : f32
    %34 = vector.broadcast %cst_25 : f32 to vector<8x1xf32>
    %35 = arith.divf %33, %34 : vector<8x1xf32>
    %36 = vector.broadcast %28 : vector<8x1xf32> to vector<8x32xf32>
    %37 = arith.subf %24, %36 : vector<8x32xf32>
    %cst_26 = arith.constant 9.99999974E-6 : f32
    %38 = vector.broadcast %cst_26 : f32 to vector<8x1xf32>
    %39 = arith.addf %35, %38 : vector<8x1xf32>
    %40 = math.rsqrt %39 : vector<8x1xf32>
    %41 = vector.broadcast %40 : vector<8x1xf32> to vector<8x32xf32>
    %42 = arith.mulf %37, %41 : vector<8x32xf32>
    %c0_27 = arith.constant 0 : index
    %c0_28 = arith.constant 0 : index
    %43 = vector.load %arg10[%c0_27, %c0_28] : memref<1x32xf32, #tpu.memory_space<vmem>>, vector<1x32xf32>
    %44 = vector.broadcast %43 : vector<1x32xf32> to vector<8x32xf32>
    %45 = arith.mulf %42, %44 : vector<8x32xf32>
    %c0_29 = arith.constant 0 : index
    %c0_30 = arith.constant 0 : index
    %46 = vector.load %arg11[%c0_29, %c0_30] : memref<1x32xf32, #tpu.memory_space<vmem>>, vector<1x32xf32>
    %47 = vector.broadcast %46 : vector<1x32xf32> to vector<8x32xf32>
    %48 = arith.addf %45, %47 : vector<8x32xf32>
    %c0_31 = arith.constant 0 : index
    %c0_32 = arith.constant 0 : index
    %c0_33 = arith.constant 0 : index
    %49 = vector.load %arg12[%c0_31, %c0_32, %c0_33] : memref<1x8x32xf32, #tpu.memory_space<vmem>>, vector<1x8x32xf32>
    %50 = vector.shape_cast %49 : vector<1x8x32xf32> to vector<8x32xf32>
    %51 = vector.shape_cast %48 : vector<8x32xf32> to vector<1x8x32xf32>
    tpu.vector_store %arg12[%c0_31, %c0_32, %c0_33], %51 {strides = array<i32>} : memref<1x8x32xf32, #tpu.memory_space<vmem>>, vector<1x8x32xf32>,
    return
  }
  func.func @transform_0(%arg0: i32, %arg1: i32) -> (i32, i32, i32) {
    %c0_i32 = arith.constant 0 : i32
    %c0_i32_0 = arith.constant 0 : i32
    return %arg0, %arg1, %c0_i32 : i32, i32, i32
  }
  func.func @transform_1(%arg0: i32, %arg1: i32) -> (i32, i32, i32) {
    %c0_i32 = arith.constant 0 : i32
    %c0_i32_0 = arith.constant 0 : i32
    %c0_i32_1 = arith.constant 0 : i32
    return %arg0, %c0_i32, %c0_i32_0 : i32, i32, i32
  }
  func.func @transform_2(%arg0: i32, %arg1: i32) -> (i32, i32) {
    %c0_i32 = arith.constant 0 : i32
    %c0_i32_0 = arith.constant 0 : i32
    %c0_i32_1 = arith.constant 0 : i32
    return %c0_i32, %c0_i32_0 : i32, i32
  }
  func.func @transform_3(%arg0: i32, %arg1: i32) -> (i32, i32) {
    %c0_i32 = arith.constant 0 : i32
    %c0_i32_0 = arith.constant 0 : i32
    %c0_i32_1 = arith.constant 0 : i32
    return %c0_i32, %c0_i32_0 : i32, i32
  }
  func.func @transform_4(%arg0: i32, %arg1: i32) -> (i32, i32) {
    %c0_i32 = arith.constant 0 : i32
    %c0_i32_0 = arith.constant 0 : i32
    %c0_i32_1 = arith.constant 0 : i32
    return %c0_i32, %c0_i32_0 : i32, i32
  }
  func.func @transform_5(%arg0: i32, %arg1: i32) -> (i32, i32) {
    %c0_i32 = arith.constant 0 : i32
    %c0_i32_0 = arith.constant 0 : i32
    %c0_i32_1 = arith.constant 0 : i32
    return %c0_i32, %c0_i32_0 : i32, i32
  }
  func.func @transform_6(%arg0: i32, %arg1: i32) -> (i32, i32) {
    %c0_i32 = arith.constant 0 : i32
    %c0_i32_0 = arith.constant 0 : i32
    %c0_i32_1 = arith.constant 0 : i32
    return %c0_i32, %c0_i32_0 : i32, i32
  }
  func.func @transform_7(%arg0: i32, %arg1: i32) -> (i32, i32) {
    %c0_i32 = arith.constant 0 : i32
    %c0_i32_0 = arith.constant 0 : i32
    %c0_i32_1 = arith.constant 0 : i32
    return %c0_i32, %c0_i32_0 : i32, i32
  }
  func.func @transform_8(%arg0: i32, %arg1: i32) -> (i32, i32) {
    %c0_i32 = arith.constant 0 : i32
    %c0_i32_0 = arith.constant 0 : i32
    %c0_i32_1 = arith.constant 0 : i32
    return %c0_i32, %c0_i32_0 : i32, i32
  }
  func.func @transform_9(%arg0: i32, %arg1: i32) -> (i32, i32) {
    %c0_i32 = arith.constant 0 : i32
    %c0_i32_0 = arith.constant 0 : i32
    %c0_i32_1 = arith.constant 0 : i32
    return %c0_i32, %c0_i32_0 : i32, i32
  }
  func.func @transform_10(%arg0: i32, %arg1: i32) -> (i32, i32, i32) {
    %c0_i32 = arith.constant 0 : i32
    %c0_i32_0 = arith.constant 0 : i32
    return %arg0, %arg1, %c0_i32 : i32, i32, i32
  }
}

</mosaic_0001>

<llo_original>
// kernel: tpu_custom_call.1
$region0: #{tpu_custom_call.1}
  #allocation0 [shape = 'u32[]', space=smem, size = 0x4, offset = 0x4, fixed_abs, tag = 'smem constant byte address 0x4 - core index']
  #allocation1 [shape = 'u32[72,128]{1,0:T(1,128)}', space=vmem, size = 0x9000, scoped, tag = 'internal scratch']
  %s0 = inlined_call_operand.vmem [shape: f32[2,8,8], index: 0, kind: input, shape index: {}]
  %s1 = inlined_call_operand.vmem [shape: f32[2,8,32], index: 1, kind: input, shape index: {}]
  %s2 = inlined_call_operand.vmem [shape: f32[32,32], index: 2, kind: input, shape index: {}]
  %s3 = inlined_call_operand.vmem [shape: f32[1,32], index: 3, kind: input, shape index: {}]
  %s4 = inlined_call_operand.vmem [shape: f32[32,128], index: 4, kind: input, shape index: {}]
  %s5 = inlined_call_operand.vmem [shape: f32[1,128], index: 5, kind: input, shape index: {}]
  %s6 = inlined_call_operand.vmem [shape: f32[128,32], index: 6, kind: input, shape index: {}]
  %s7 = inlined_call_operand.vmem [shape: f32[1,32], index: 7, kind: input, shape index: {}]
  %s8 = inlined_call_operand.vmem [shape: f32[1,32], index: 8, kind: input, shape index: {}]
  %s9 = inlined_call_operand.vmem [shape: f32[1,32], index: 9, kind: input, shape index: {}]
  %s10 = inlined_call_operand.hbm [shape: f32[2,8,32], index: 10, kind: output, shape index: {}]
  %s11 = sld [smem:[#allocation0]]
  $region73: #{tpu_custom_call.1} parent=0
    _
  %s13 = ssub.s32 1, %s11
  %s14 = scalar_select 0, %s13, %s11
  $region1: #{tpu_custom_call.1} parent=0
    #allocation2 [shape = 'u8[8192]{0}', space=vmem, size = 0x2000, scoped, tag = 'output window, operand 0']
    #allocation3 [shape = 's32[2]{0}', space=sflag, size = 0x8, scoped, tag = 'scoped memory for tpu_custom_call.1']
    %15 = vsyncpa [#allocation3], 0
    %s16 = scalar_lea.sflag [#allocation3], 1
    %17 = vsyncpa %s16, 0
    loop: start=0, step=1, limit=4
    $region2: #{tpu_custom_call.1} parent=1 // loop_pre_header
      _
    $region3: #{tpu_custom_call.1} parent=1 // loop_header
      %s19 = sphi 0, %s23
      %p20 = scmp.ge.s32.totalorder %s19, 4
      %s26 = sphi 0, %s38
      %s27 = sphi 0, %s34
      %s28 = sphi 0, %s26
      %s29 = sphi 0, %s27
      %s30 = sphi 0, %s28
      %s31 = sphi 0, %s29
      %s43 = sphi 0, %s45
      %s46 = sphi 0, %s43
      %s47 = sphi 0, %s46
      %s63 = sphi 0, %s47
      %s69 = sphi 0, %s71
      %s72 = sphi 0, %s69
      %s73 = sphi 0, %s72
      %s89 = sphi 0, %s73
      %s93 = sphi 0, %s93
      %s95 = sphi 0, %s93
      %s96 = sphi 0, %s95
      %s110 = sphi 0, %s96
      %s114 = sphi 0, %s114
      %s116 = sphi 0, %s114
      %s117 = sphi 0, %s116
      %s131 = sphi 0, %s117
      %s135 = sphi 0, %s135
      %s137 = sphi 0, %s135
      %s138 = sphi 0, %s137
      %s152 = sphi 0, %s138
      %s156 = sphi 0, %s156
      %s158 = sphi 0, %s156
      %s159 = sphi 0, %s158
      %s173 = sphi 0, %s159
      %s177 = sphi 0, %s177
      %s179 = sphi 0, %s177
      %s180 = sphi 0, %s179
      %s194 = sphi 0, %s180
      %s198 = sphi 0, %s198
      %s200 = sphi 0, %s198
      %s201 = sphi 0, %s200
      %s215 = sphi 0, %s201
      %s219 = sphi 0, %s219
      %s221 = sphi 0, %s219
      %s222 = sphi 0, %s221
      %s236 = sphi 0, %s222
      %s240 = sphi 0, %s240
      %s242 = sphi 0, %s240
      %s243 = sphi 0, %s242
      %s257 = sphi 0, %s243
      %s265 = sphi 0, %s267
      %s268 = sphi 0, %s265
      %s269 = sphi 0, %s268
      %s285 = sphi 0, %s269
    $region4: #{tpu_custom_call.1} parent=1 // loop_header_branch
      %22 = sbr.rel (%p20) target = $region8
    $region5: #{tpu_custom_call.1} parent=1 // loop_body
      %s24 = ssub.s32 %s19, 1
      %s25 = ssub.s32 %s19, 2
      %s32 = sadd.s32 1, %s27
      %p33 = scmp.ge.s32.totalorder %s32, 1
      %s34 = scalar_select %p33, 0, %s32
      %s35 = sadd.s32 1, %s26
      %s36 = scalar_select %p33, %s35, %s26
      %p37 = scmp.ge.s32.totalorder %s36, 2
      %s38 = scalar_select %p37, 0, %s36
      %s39 = ssub.s32 %s26, %s38
      %s40 = ssub.s32 %s27, %s34
      %s41 = sor.u32 %s39, %s40
      %p42 = scmp.eq.s32.totalorder %s41, 0
      %s44 = sadd.s32 %s43, 1
      %s45 = scalar_select %p42, %s43, %s44
      %p48 = pneg %p42
      %p49 = scmp.eq.s32.totalorder %s19, 1
      %p50 = por %p48, %p49
      %p51 = scmp.ne.s32.totalorder %s43, %s46
      %p52 = scmp.eq.s32.totalorder %s19, 0
      %p53 = por %p51, %p52
      %p54 = scmp.ne.s32.totalorder %s43, %s46
      %p55 = scmp.eq.s32.totalorder %s24, 1
      %p56 = por %p54, %p55
      %p57 = scmp.ne.s32.totalorder %s46, %s47
      %p58 = scmp.eq.s32.totalorder %s24, 0
      %p59 = por %p57, %p58
      %p60 = scmp.ne.s32.totalorder %s46, %s47
      %p61 = scmp.eq.s32.totalorder %s25, 1
      %p62 = por %p60, %p61
      %p64 = scmp.ne.s32.totalorder %s47, %s63
      %p65 = scmp.eq.s32.totalorder %s25, 0
      %p66 = por %p64, %p65
      %s67 = ssub.s32 %s26, %s38
      %p68 = scmp.eq.s32.totalorder %s67, 0
      %s70 = sadd.s32 %s69, 1
      %s71 = scalar_select %p68, %s69, %s70
      %p74 = pneg %p68
      %p75 = scmp.eq.s32.totalorder %s19, 1
      %p76 = por %p74, %p75
      %p77 = scmp.ne.s32.totalorder %s69, %s72
      %p78 = scmp.eq.s32.totalorder %s19, 0
      %p79 = por %p77, %p78
      %p80 = scmp.ne.s32.totalorder %s69, %s72
      %p81 = scmp.eq.s32.totalorder %s24, 1
      %p82 = por %p80, %p81
      %p83 = scmp.ne.s32.totalorder %s72, %s73
      %p84 = scmp.eq.s32.totalorder %s24, 0
      %p85 = por %p83, %p84
      %p86 = scmp.ne.s32.totalorder %s72, %s73
      %p87 = scmp.eq.s32.totalorder %s25, 1
      %p88 = por %p86, %p87
      %p90 = scmp.ne.s32.totalorder %s73, %s89
      %p91 = scmp.eq.s32.totalorder %s25, 0
      %p92 = por %p90, %p91
      %s94 = sadd.s32 %s93, 1
      %p97 = scmp.eq.s32.totalorder %s19, 1
      %p98 = scmp.ne.s32.totalorder %s93, %s95
      %p99 = scmp.eq.s32.totalorder %s19, 0
      %p100 = por %p98, %p99
      %p101 = scmp.ne.s32.totalorder %s93, %s95
      %p102 = scmp.eq.s32.totalorder %s24, 1
      %p103 = por %p101, %p102
      %p104 = scmp.ne.s32.totalorder %s95, %s96
      %p105 = scmp.eq.s32.totalorder %s24, 0
      %p106 = por %p104, %p105
      %p107 = scmp.ne.s32.totalorder %s95, %s96
      %p108 = scmp.eq.s32.totalorder %s25, 1
      %p109 = por %p107, %p108
      %p111 = scmp.ne.s32.totalorder %s96, %s110
      %p112 = scmp.eq.s32.totalorder %s25, 0
      %p113 = por %p111, %p112
      %s115 = sadd.s32 %s114, 1
      %p118 = scmp.eq.s32.totalorder %s19, 1
      %p119 = scmp.ne.s32.totalorder %s114, %s116
      %p120 = scmp.eq.s32.totalorder %s19, 0
      %p121 = por %p119, %p120
      %p122 = scmp.ne.s32.totalorder %s114, %s116
      %p123 = scmp.eq.s32.totalorder %s24, 1
      %p124 = por %p122, %p123
      %p125 = scmp.ne.s32.totalorder %s116, %s117
      %p126 = scmp.eq.s32.totalorder %s24, 0
      %p127 = por %p125, %p126
      %p128 = scmp.ne.s32.totalorder %s116, %s117
      %p129 = scmp.eq.s32.totalorder %s25, 1
      %p130 = por %p128, %p129
      %p132 = scmp.ne.s32.totalorder %s117, %s131
      %p133 = scmp.eq.s32.totalorder %s25, 0
      %p134 = por %p132, %p133
      %s136 = sadd.s32 %s135, 1
      %p139 = scmp.eq.s32.totalorder %s19, 1
      %p140 = scmp.ne.s32.totalorder %s135, %s137
      %p141 = scmp.eq.s32.totalorder %s19, 0
      %p142 = por %p140, %p141
      %p143 = scmp.ne.s32.totalorder %s135, %s137
      %p144 = scmp.eq.s32.totalorder %s24, 1
      %p145 = por %p143, %p144
      %p146 = scmp.ne.s32.totalorder %s137, %s138
      %p147 = scmp.eq.s32.totalorder %s24, 0
      %p148 = por %p146, %p147
      %p149 = scmp.ne.s32.totalorder %s137, %s138
      %p150 = scmp.eq.s32.totalorder %s25, 1
      %p151 = por %p149, %p150
      %p153 = scmp.ne.s32.totalorder %s138, %s152
      %p154 = scmp.eq.s32.totalorder %s25, 0
      %p155 = por %p153, %p154
      %s157 = sadd.s32 %s156, 1
      %p160 = scmp.eq.s32.totalorder %s19, 1
      %p161 = scmp.ne.s32.totalorder %s156, %s158
      %p162 = scmp.eq.s32.totalorder %s19, 0
      %p163 = por %p161, %p162
      %p164 = scmp.ne.s32.totalorder %s156, %s158
      %p165 = scmp.eq.s32.totalorder %s24, 1
      %p166 = por %p164, %p165
      %p167 = scmp.ne.s32.totalorder %s158, %s159
      %p168 = scmp.eq.s32.totalorder %s24, 0
      %p169 = por %p167, %p168
      %p170 = scmp.ne.s32.totalorder %s158, %s159
      %p171 = scmp.eq.s32.totalorder %s25, 1
      %p172 = por %p170, %p171
      %p174 = scmp.ne.s32.totalorder %s159, %s173
      %p175 = scmp.eq.s32.totalorder %s25, 0
      %p176 = por %p174, %p175
      %s178 = sadd.s32 %s177, 1
      %p181 = scmp.eq.s32.totalorder %s19, 1
      %p182 = scmp.ne.s32.totalorder %s177, %s179
      %p183 = scmp.eq.s32.totalorder %s19, 0
      %p184 = por %p182, %p183
      %p185 = scmp.ne.s32.totalorder %s177, %s179
      %p186 = scmp.eq.s32.totalorder %s24, 1
      %p187 = por %p185, %p186
      %p188 = scmp.ne.s32.totalorder %s179, %s180
      %p189 = scmp.eq.s32.totalorder %s24, 0
      %p190 = por %p188, %p189
      %p191 = scmp.ne.s32.totalorder %s179, %s180
      %p192 = scmp.eq.s32.totalorder %s25, 1
      %p193 = por %p191, %p192
      %p195 = scmp.ne.s32.totalorder %s180, %s194
      %p196 = scmp.eq.s32.totalorder %s25, 0
      %p197 = por %p195, %p196
      %s199 = sadd.s32 %s198, 1
      %p202 = scmp.eq.s32.totalorder %s19, 1
      %p203 = scmp.ne.s32.totalorder %s198, %s200
      %p204 = scmp.eq.s32.totalorder %s19, 0
      %p205 = por %p203, %p204
      %p206 = scmp.ne.s32.totalorder %s198, %s200
      %p207 = scmp.eq.s32.totalorder %s24, 1
      %p208 = por %p206, %p207
      %p209 = scmp.ne.s32.totalorder %s200, %s201
      %p210 = scmp.eq.s32.totalorder %s24, 0
      %p211 = por %p209, %p210
      %p212 = scmp.ne.s32.totalorder %s200, %s201
      %p213 = scmp.eq.s32.totalorder %s25, 1
      %p214 = por %p212, %p213
      %p216 = scmp.ne.s32.totalorder %s201, %s215
      %p217 = scmp.eq.s32.totalorder %s25, 0
      %p218 = por %p216, %p217
      %s220 = sadd.s32 %s219, 1
      %p223 = scmp.eq.s32.totalorder %s19, 1
      %p224 = scmp.ne.s32.totalorder %s219, %s221
      %p225 = scmp.eq.s32.totalorder %s19, 0
      %p226 = por %p224, %p225
      %p227 = scmp.ne.s32.totalorder %s219, %s221
      %p228 = scmp.eq.s32.totalorder %s24, 1
      %p229 = por %p227, %p228
      %p230 = scmp.ne.s32.totalorder %s221, %s222
      %p231 = scmp.eq.s32.totalorder %s24, 0
      %p232 = por %p230, %p231
      %p233 = scmp.ne.s32.totalorder %s221, %s222
      %p234 = scmp.eq.s32.totalorder %s25, 1
      %p235 = por %p233, %p234
      %p237 = scmp.ne.s32.totalorder %s222, %s236
      %p238 = scmp.eq.s32.totalorder %s25, 0
      %p239 = por %p237, %p238
      %s241 = sadd.s32 %s240, 1
      %p244 = scmp.eq.s32.totalorder %s19, 1
      %p245 = scmp.ne.s32.totalorder %s240, %s242
      %p246 = scmp.eq.s32.totalorder %s19, 0
      %p247 = por %p245, %p246
      %p248 = scmp.ne.s32.totalorder %s240, %s242
      %p249 = scmp.eq.s32.totalorder %s24, 1
      %p250 = por %p248, %p249
      %p251 = scmp.ne.s32.totalorder %s242, %s243
      %p252 = scmp.eq.s32.totalorder %s24, 0
      %p253 = por %p251, %p252
      %p254 = scmp.ne.s32.totalorder %s242, %s243
      %p255 = scmp.eq.s32.totalorder %s25, 1
      %p256 = por %p254, %p255
      %p258 = scmp.ne.s32.totalorder %s243, %s257
      %p259 = scmp.eq.s32.totalorder %s25, 0
      %p260 = por %p258, %p259
      %s261 = ssub.s32 %s26, %s38
      %s262 = ssub.s32 %s27, %s34
      %s263 = sor.u32 %s261, %s262
      %p264 = scmp.eq.s32.totalorder %s263, 0
      %s266 = sadd.s32 %s265, 1
      %s267 = scalar_select %p264, %s265, %s266
      %p270 = pneg %p264
      %p271 = scmp.eq.s32.totalorder %s19, 1
      %p272 = por %p270, %p271
      %p273 = scmp.ne.s32.totalorder %s265, %s268
      %p274 = scmp.eq.s32.totalorder %s19, 0
      %p275 = por %p273, %p274
      %p276 = scmp.ne.s32.totalorder %s265, %s268
      %p277 = scmp.eq.s32.totalorder %s24, 1
      %p278 = por %p276, %p277
      %p279 = scmp.ne.s32.totalorder %s268, %s269
      %p280 = scmp.eq.s32.totalorder %s24, 0
      %p281 = por %p279, %p280
      %p282 = scmp.ne.s32.totalorder %s268, %s269
      %p283 = scmp.eq.s32.totalorder %s25, 1
      %p284 = por %p282, %p283
      %p286 = scmp.ne.s32.totalorder %s269, %s285
      %p287 = scmp.eq.s32.totalorder %s25, 0
      %p288 = por %p286, %p287
      %p289 = scmp.le.s32.totalorder 1, %s19
      %p290 = scmp.lt.s32.totalorder %s19, 3
      %p291 = pnand %p289, %p290
      %p292 = pneg %p291
      // Predicated region
      $region9: #{tpu_custom_call.1} parent=5 // pred_check
        _
      $region10: #{tpu_custom_call.1} parent=5 // pred_check_branch
        %294 = sbr.rel (%p291) target = $region12
      $region11: #{tpu_custom_call.1} parent=5 // pred_region
        %s295 = ssub.s32 %s19, 1
        // Predicated region
        $region13: #{tpu_custom_call.1} parent=11 // pred_check
          %p296 = pneg %p106
        $region14: #{tpu_custom_call.1} parent=11 // pred_check_branch
          %298 = sbr.rel (%p296) target = $region16
        $region15: #{tpu_custom_call.1} parent=11 // pred_region
          _
        $region16: #{tpu_custom_call.1} parent=11 // pred_fallthru
          _
        // Predicated region
        $region17: #{tpu_custom_call.1} parent=11 // pred_check
          %p299 = pneg %p127
        $region18: #{tpu_custom_call.1} parent=11 // pred_check_branch
          %301 = sbr.rel (%p299) target = $region20
        $region19: #{tpu_custom_call.1} parent=11 // pred_region
          _
        $region20: #{tpu_custom_call.1} parent=11 // pred_fallthru
          _
        // Predicated region
        $region21: #{tpu_custom_call.1} parent=11 // pred_check
          %p302 = pneg %p148
        $region22: #{tpu_custom_call.1} parent=11 // pred_check_branch
          %304 = sbr.rel (%p302) target = $region24
        $region23: #{tpu_custom_call.1} parent=11 // pred_region
          _
        $region24: #{tpu_custom_call.1} parent=11 // pred_fallthru
          _
        // Predicated region
        $region25: #{tpu_custom_call.1} parent=11 // pred_check
          %p305 = pneg %p169
        $region26: #{tpu_custom_call.1} parent=11 // pred_check_branch
          %307 = sbr.rel (%p305) target = $region28
        $region27: #{tpu_custom_call.1} parent=11 // pred_region
          _
        $region28: #{tpu_custom_call.1} parent=11 // pred_fallthru
          _
        // Predicated region
        $region29: #{tpu_custom_call.1} parent=11 // pred_check
          %p308 = pneg %p190
        $region30: #{tpu_custom_call.1} parent=11 // pred_check_branch
          %310 = sbr.rel (%p308) target = $region32
        $region31: #{tpu_custom_call.1} parent=11 // pred_region
          _
        $region32: #{tpu_custom_call.1} parent=11 // pred_fallthru
          _
        // Predicated region
        $region33: #{tpu_custom_call.1} parent=11 // pred_check
          %p311 = pneg %p211
        $region34: #{tpu_custom_call.1} parent=11 // pred_check_branch
          %313 = sbr.rel (%p311) target = $region36
        $region35: #{tpu_custom_call.1} parent=11 // pred_region
          _
        $region36: #{tpu_custom_call.1} parent=11 // pred_fallthru
          _
        // Predicated region
        $region37: #{tpu_custom_call.1} parent=11 // pred_check
          %p314 = pneg %p232
        $region38: #{tpu_custom_call.1} parent=11 // pred_check_branch
          %316 = sbr.rel (%p314) target = $region40
        $region39: #{tpu_custom_call.1} parent=11 // pred_region
          _
        $region40: #{tpu_custom_call.1} parent=11 // pred_fallthru
          _
        // Predicated region
        $region41: #{tpu_custom_call.1} parent=11 // pred_check
          %p317 = pneg %p253
        $region42: #{tpu_custom_call.1} parent=11 // pred_check_branch
          %319 = sbr.rel (%p317) target = $region44
        $region43: #{tpu_custom_call.1} parent=11 // pred_region
          _
        $region44: #{tpu_custom_call.1} parent=11 // pred_fallthru
          _
      $region12: #{tpu_custom_call.1} parent=5 // pred_fallthru
        _
      %p320 = scmp.lt.s32.totalorder %s19, 2
      // Predicated region
      $region45: #{tpu_custom_call.1} parent=5 // pred_check
        %p321 = pneg %p320
      $region46: #{tpu_custom_call.1} parent=5 // pred_check_branch
        %323 = sbr.rel (%p321) target = $region48
      $region47: #{tpu_custom_call.1} parent=5 // pred_region
        // Predicated region
        $region49: #{tpu_custom_call.1} parent=47 // pred_check
          %p324 = pneg %p53
        $region50: #{tpu_custom_call.1} parent=47 // pred_check_branch
          %326 = sbr.rel (%p324) target = $region52
        $region51: #{tpu_custom_call.1} parent=47 // pred_region
          %p327 = scmp.lt.s32.totalorder %s26, 1
          %s328 = scalar_select %p327, %s26, 1
          %p329 = scmp.lt.s32.totalorder %s27, 0
          %s330 = scalar_select %p329, %s27, 0
          %s331 = sadd.s32 %s330, %s328
          %s332 = smul.addr %s331, 8
          %s333 = scalar_lea.vmem %s0, %s332
        $region52: #{tpu_custom_call.1} parent=47 // pred_fallthru
          _
        // Predicated region
        $region53: #{tpu_custom_call.1} parent=47 // pred_check
          %p334 = pneg %p79
        $region54: #{tpu_custom_call.1} parent=47 // pred_check_branch
          %336 = sbr.rel (%p334) target = $region56
        $region55: #{tpu_custom_call.1} parent=47 // pred_region
          %p337 = scmp.lt.s32.totalorder %s26, 1
          %s338 = scalar_select %p337, %s26, 1
          %s339 = smul.addr %s338, 8
          %s340 = scalar_lea.vmem %s1, %s339
        $region56: #{tpu_custom_call.1} parent=47 // pred_fallthru
          _
      $region48: #{tpu_custom_call.1} parent=5 // pred_fallthru
        _
      %p341 = scmp.le.s32.totalorder 1, %s19
      %p342 = scmp.lt.s32.totalorder %s19, 3
      %p343 = pnand %p341, %p342
      %p344 = pneg %p343
      // Predicated region
      $region57: #{tpu_custom_call.1} parent=5 // pred_check
        _
      $region58: #{tpu_custom_call.1} parent=5 // pred_check_branch
        %346 = sbr.rel (%p343) target = $region60
      $region59: #{tpu_custom_call.1} parent=5 // pred_region
        %s347 = ssub.s32 %s19, 1
        %p348 = scmp.lt.s32.totalorder %s28, 1
        %s349 = scalar_select %p348, %s28, 1
        %p350 = scmp.lt.s32.totalorder %s29, 0
        %s351 = scalar_select %p350, %s29, 0
        %s352 = sadd.s32 %s351, %s349
        %s353 = smul.addr %s352, 8
        %s354 = scalar_lea.vmem %s0, %s353
        %p355 = pneg %p59
        %p356 = pneg %p56
        %p357 = scmp.lt.s32.totalorder %s28, 1
        %s358 = scalar_select %p357, %s28, 1
        %s359 = smul.addr %s358, 8
        %s360 = scalar_lea.vmem %s1, %s359
        %p361 = pneg %p85
        %p362 = pneg %p82
        %p363 = pneg %p106
        %p364 = pneg %p103
        %p365 = pneg %p127
        %p366 = pneg %p124
        %p367 = pneg %p148
        %p368 = pneg %p145
        %p369 = pneg %p169
        %p370 = pneg %p166
        %p371 = pneg %p190
        %p372 = pneg %p187
        %p373 = pneg %p211
        %p374 = pneg %p208
        %p375 = pneg %p232
        %p376 = pneg %p229
        %p377 = pneg %p253
        %p378 = pneg %p250
        %p379 = pneg %p281
        %p380 = pneg %p278
        %s381 = sand.u32 %s268, 1
        %s382 = scalar_lea.sflag [#allocation3], %s381
        %s383 = sand.u32 %s268, 1
        %s384 = smul.addr %s383, 8
        %s385 = scalar_lea.vmem [#allocation2], %s384
        %p386 = scmp.lt.s32.totalorder %s28, 1
        %s387 = scalar_select %p386, %s28, 1
        %p388 = scmp.lt.s32.totalorder %s29, 0
        %s389 = scalar_select %p388, %s29, 0
        %s390 = sadd.s32 %s389, %s387
        %s391 = smul.addr %s390, 8
        %s392 = scalar_lea.vmem %s0, %s391
        %p393 = scmp.lt.s32.totalorder %s28, 1
        %s394 = scalar_select %p393, %s28, 1
        %s395 = smul.addr %s394, 8
        %s396 = scalar_lea.vmem %s1, %s395
        %v397 = vld [vmem:[%s392] sm:$0xff]
        %v398 = vld [vmem:[%s396] sm:$0xff]
        %vm399 = vcmask 64512
        %v401 = vsel %vm399, %v397, 0
        %403 = vmatpush.msra.mxu0 0.0
        %404 = vmatpush.msra.mxu0 0.0
        %405 = vmatpush.msra.mxu0 0.0
        %406 = vmatpush.msra.mxu0 0.0
        %407 = vmatpush.msra.mxu0 0.0
        %408 = vmatpush.msra.mxu0 0.0
        %409 = vmatpush.msra.mxu0 0.0
        %410 = vmatpush.msra.mxu0 0.0
        %411 = vmatpush.msra.mxu0 0.0
        %412 = vmatpush.msra.mxu0 0.0
        %413 = vmatpush.msra.mxu0 0.0
        %414 = vmatpush.msra.mxu0 0.0
        %415 = vmatpush.msra.mxu0 0.0
        %416 = vmatpush.msra.mxu0 0.0
        %417 = vmatpush.msra.mxu0 0.0
        %418 = vmatpush.msra.mxu0 %v398
        %419 = vmatmul.f32.gmra.mxu0 %v401
        %v420 = vpop.f32.mrf.mxu0
        %v421 = vadd.f32 0.0, %v420
        %422 = vdwg.mxu0
        %v423 = vld [vmem:[%s2] sm:$0xff]
        %v424 = vld [vmem:[%s2 + $0x8] sm:$0xff]
        %v425 = vld [vmem:[%s2 + $0x10] sm:$0xff]
        %v426 = vld [vmem:[%s2 + $0x18] sm:$0xff]
        %v427 = vld [vmem:[%s3] sm:$0x1]
        %v429 = vperm.slane %v427, 0
        %vm431 = vcmask 261120
        %v433 = vsel %vm431, %v421, 0
        %435 = vmatpush.msra.mxu0 0.0
        %436 = vmatpush.msra.mxu0 0.0
        %437 = vmatpush.msra.mxu0 0.0
        %438 = vmatpush.msra.mxu0 0.0
        %439 = vmatpush.msra.mxu0 0.0
        %440 = vmatpush.msra.mxu0 0.0
        %441 = vmatpush.msra.mxu0 0.0
        %442 = vmatpush.msra.mxu0 0.0
        %443 = vmatpush.msra.mxu0 0.0
        %444 = vmatpush.msra.mxu0 0.0
        %445 = vmatpush.msra.mxu0 0.0
        %446 = vmatpush.msra.mxu0 0.0
        %447 = vmatpush.msra.mxu0 %v426
        %448 = vmatpush.msra.mxu0 %v425
        %449 = vmatpush.msra.mxu0 %v424
        %450 = vmatpush.msra.mxu0 %v423
        %451 = vmatmul.f32.gmra.mxu0 %v433
        %v452 = vpop.f32.mrf.mxu0
        %v453 = vadd.f32 %v429, %v452
        %454 = vdwg.mxu0
        %v455 = vmax.f32 %v453, 0.0
        %v456 = vld [vmem:[%s4] sm:$0xff]
        %v457 = vld [vmem:[%s4 + $0x8] sm:$0xff]
        %v458 = vld [vmem:[%s4 + $0x10] sm:$0xff]
        %v459 = vld [vmem:[%s4 + $0x18] sm:$0xff]
        %v460 = vld [vmem:[%s5] sm:$0x1]
        %v462 = vperm.slane %v460, 0
        %v465 = vsel %vm431, %v455, 0
        %467 = vmatpush.msra.mxu0 0.0
        %468 = vmatpush.msra.mxu0 0.0
        %469 = vmatpush.msra.mxu0 0.0
        %470 = vmatpush.msra.mxu0 0.0
        %471 = vmatpush.msra.mxu0 0.0
        %472 = vmatpush.msra.mxu0 0.0
        %473 = vmatpush.msra.mxu0 0.0
        %474 = vmatpush.msra.mxu0 0.0
        %475 = vmatpush.msra.mxu0 0.0
        %476 = vmatpush.msra.mxu0 0.0
        %477 = vmatpush.msra.mxu0 0.0
        %478 = vmatpush.msra.mxu0 0.0
        %479 = vmatpush.msra.mxu0 %v459
        %480 = vmatpush.msra.mxu0 %v458
        %481 = vmatpush.msra.mxu0 %v457
        %482 = vmatpush.msra.mxu0 %v456
        %483 = vmatmul.f32.gmra.mxu0 %v465
        %v484 = vpop.f32.mrf.mxu0
        %v485 = vadd.f32 %v462, %v484
        %486 = vdwg.mxu0
        %v487 = vmax.f32 %v485, 0.0
        %v488 = vld [vmem:[%s6] sm:$0xff]
        %v489 = vld [vmem:[%s6 + $0x8] sm:$0xff]
        %v490 = vld [vmem:[%s6 + $0x10] sm:$0xff]
        %v491 = vld [vmem:[%s6 + $0x18] sm:$0xff]
        %v492 = vld [vmem:[%s6 + $0x20] sm:$0xff]
        %v493 = vld [vmem:[%s6 + $0x28] sm:$0xff]
        %v494 = vld [vmem:[%s6 + $0x30] sm:$0xff]
        %v495 = vld [vmem:[%s6 + $0x38] sm:$0xff]
        %v496 = vld [vmem:[%s6 + $0x40] sm:$0xff]
        %v497 = vld [vmem:[%s6 + $0x48] sm:$0xff]
        %v498 = vld [vmem:[%s6 + $0x50] sm:$0xff]
        %v499 = vld [vmem:[%s6 + $0x58] sm:$0xff]
        %v500 = vld [vmem:[%s6 + $0x60] sm:$0xff]
        %v501 = vld [vmem:[%s6 + $0x68] sm:$0xff]
        %v502 = vld [vmem:[%s6 + $0x70] sm:$0xff]
        %v503 = vld [vmem:[%s6 + $0x78] sm:$0xff]
        %v504 = vld [vmem:[%s7] sm:$0x1]
        %v506 = vperm.slane %v504, 0
        %508 = vmatpush.msra.mxu0 %v503
        %509 = vmatpush.msra.mxu0 %v502
        %510 = vmatpush.msra.mxu0 %v501
        %511 = vmatpush.msra.mxu0 %v500
        %512 = vmatpush.msra.mxu0 %v499
        %513 = vmatpush.msra.mxu0 %v498
        %514 = vmatpush.msra.mxu0 %v497
        %515 = vmatpush.msra.mxu0 %v496
        %516 = vmatpush.msra.mxu0 %v495
        %517 = vmatpush.msra.mxu0 %v494
        %518 = vmatpush.msra.mxu0 %v493
        %519 = vmatpush.msra.mxu0 %v492
        %520 = vmatpush.msra.mxu0 %v491
        %521 = vmatpush.msra.mxu0 %v490
        %522 = vmatpush.msra.mxu0 %v489
        %523 = vmatpush.msra.mxu0 %v488
        %524 = vmatmul.f32.gmra.mxu0 %v487
        %v525 = vpop.f32.mrf.mxu0
        %v526 = vadd.f32 %v506, %v525
        %527 = vdwg.mxu0
        %v528 = vadd.f32 %v526, %v455
        %v529 = vsel %vm431, %v528, 0.0
        %530 = vadd.xlane.f32.xlu0 %v529
        %v531 = vpop.xlane.xlu0 %530
        %v532 = vrcp.pop 32.0
        %v533 = vmul.f32 32.0, %v532
        %v534 = vsub.f32 1.0, %v533
        %v535 = vmul.f32 %v532, %v534
        %v536 = vadd.f32 %v532, %v535
        %vm537 = vweird.f32 %v532
        %v538 = vsel %vm537, %v532, %v536
        %v539 = vmul.f32 %v531, %v538
        %v540 = vsub.f32 %v528, %v539
        %v541 = vmul.f32 %v540, %v540
        %v542 = vsel %vm431, %v541, 0.0
        %543 = vadd.xlane.f32.xlu0 %v542
        %v544 = vpop.xlane.xlu0 %543
        %v545 = vmul.f32 %v544, %v538
        %v546 = vadd.f32 %v545, 1e-05
        %v547 = vrsqrt.pop %v546
        %v548 = vmul.f32 %v547, %v546
        %v549 = vmul.f32 %v548, %v547
        %v550 = vmul.f32 0.5, %v549
        %v551 = vsub.f32 1.5, %v550
        %v552 = vmul.f32 %v547, %v551
        %vm553 = vweird.f32 %v546
        %vm554 = vweird.f32 %v547
        %vm555 = vmor %vm553, %vm554
        %v556 = vsel %vm555, %v547, %v552
        %v557 = vmul.f32 %v540, %v556
        %v558 = vld [vmem:[%s8] sm:$0x1]
        %v560 = vperm.slane %v558, 0
        %v562 = vmul.f32 %v557, %v560
        %v563 = vld [vmem:[%s9] sm:$0x1]
        %v565 = vperm.slane %v563, 0
        %v567 = vadd.f32 %v562, %v565
        %568 = vst.msk [vmem:[%s385] sm:$0xff] %vm431, %v567
        %s569 = sand.u32 %s268, 1
        %s570 = scalar_lea.sflag [#allocation3], %s569
        %s571 = sand.u32 %s268, 1
        %s572 = smul.addr %s571, 8
        %s573 = scalar_lea.vmem [#allocation2], %s572
        // Predicated region
        $region61: #{tpu_custom_call.1} parent=59 // pred_check
          %p574 = pneg %p278
        $region62: #{tpu_custom_call.1} parent=59 // pred_check_branch
          %576 = sbr.rel (%p574) target = $region64
        $region63: #{tpu_custom_call.1} parent=59 // pred_region
          %578 = vsyncadd %s570, 0
          %s579 = sadd.s32 %s29, %s28
          %s580 = smul.addr %s579, 8
          %s581 = scalar_lea.hbm %s10, %s580
          %s583 = sshll.u32 %s573, 4
          %s584 = int_to_ptr.vmem [resolvable:$true] %s583
          %s585 = sshll.u32 %s581, 4
          %s586 = int_to_ptr.hbm [resolvable:$true] %s585
          %588 = dma.vmem_to_hbm [thread:$0]  %s584, 128, %s586, %s570
        $region64: #{tpu_custom_call.1} parent=59 // pred_fallthru
          _
      $region60: #{tpu_custom_call.1} parent=5 // pred_fallthru
        _
      %p589 = scmp.le.s32.totalorder 2, %s19
      // Predicated region
      $region65: #{tpu_custom_call.1} parent=5 // pred_check
        %p590 = pneg %p589
      $region66: #{tpu_custom_call.1} parent=5 // pred_check_branch
        %592 = sbr.rel (%p590) target = $region68
      $region67: #{tpu_custom_call.1} parent=5 // pred_region
        %s593 = ssub.s32 %s19, 2
        // Predicated region
        $region69: #{tpu_custom_call.1} parent=67 // pred_check
          %p594 = pneg %p284
        $region70: #{tpu_custom_call.1} parent=67 // pred_check_branch
          %596 = sbr.rel (%p594) target = $region72
        $region71: #{tpu_custom_call.1} parent=67 // pred_region
          %s597 = sand.u32 %s269, 1
          %s598 = scalar_lea.sflag [#allocation3], %s597
          %s599 = sand.u32 %s269, 1
          %s600 = smul.addr %s599, 8
          %s601 = scalar_lea.vmem [#allocation2], %s600
          %603 = dma.done %s598, 128
        $region72: #{tpu_custom_call.1} parent=67 // pred_fallthru
          _
      $region68: #{tpu_custom_call.1} parent=5 // pred_fallthru
        _
    $region6: #{tpu_custom_call.1} parent=1 // loop_footer
      %s23 = sadd.s32 1, %s19
    $region7: #{tpu_custom_call.1} parent=1 // loop_footer_branch
      %18 = sbr.rel target = $region3
    $region8: #{tpu_custom_call.1} parent=1 // loop_exit
      _
    %604 = vsyncpa [#allocation3], 1
    %s605 = scalar_lea.sflag [#allocation3], 1
    %606 = vsyncpa %s605, 1

</llo_original>
